<compile_context>
chip_gen: v7x
topology: tpu7x:2x2x1
jax: 0.10.0
libtpu: 0.0.40
codegen_flags: <defaults>
</compile_context>

<pallas_src>
import functools

import jax
import jax.numpy as jnp
from jax.experimental import pallas as pl
from jax.experimental.pallas import tpu as pltpu

LANE = 128          # TPU lane width
SUBLANE = 8         # TPU sublane width
DEFAULT_TILE_M = 256  # fills the 256-wide MXU on v6e/v7x, multiple of 128 for v5e


def _round_up(n, m):
    return ((n + m - 1) // m) * m


def _make_mlp_kernel(num_layers):
    """Fused MLP kernel: all layers computed per batch tile, weights VMEM-resident."""

    def kernel(*refs):
        # refs = (x_ref, w0, b0, w1, b1, ..., w_{L-1}, b_{L-1}, out_ref)
        x_ref = refs[0]
        out_ref = refs[-1]
        h = x_ref[...].astype(jnp.float32)          # (TM, in_pad) f32
        for l in range(num_layers):
            w = refs[1 + 2 * l][...]                # (in_pad_l, out_pad_l) bf16
            b = refs[2 + 2 * l][...]                # (1, out_pad_l) f32
            h = jnp.dot(h.astype(jnp.bfloat16), w,
                        preferred_element_type=jnp.float32) + b
            if l < num_layers - 1:                  # ReLU on all but the last layer
                h = jnp.maximum(h, 0.0)
        out_ref[...] = h.astype(out_ref.dtype)

    return kernel


def init_params(key, input_size, units_per_layer):
    """Parameter init mirroring the PyTorch module's layer sizes (f32, PyTorch-like)."""
    if len(units_per_layer) < 2:
        raise ValueError("units_per_layer must have at least two elements")
    dims = [(input_size, units_per_layer[1])]
    for i in range(1, len(units_per_layer) - 2):
        dims.append((units_per_layer[i], units_per_layer[i + 1]))
    dims.append((units_per_layer[-2], units_per_layer[-1]))

    params = []
    for (fan_in, fan_out) in dims:
        key, kw, kb = jax.random.split(key, 3)
        bound = 1.0 / jnp.sqrt(fan_in)
        w_t = jax.random.uniform(kw, (fan_in, fan_out), jnp.float32, -bound, bound)
        b = jax.random.uniform(kb, (1, fan_out), jnp.float32, -bound, bound)
        params.append((w_t, b))
    return params


def _pad_params(params):
    """Zero-pad every layer to 128-multiple feature dims; weights -> bf16, biases f32."""
    padded = []
    for (w, b) in params:
        fi, fo = w.shape
        fip, fop = _round_up(fi, LANE), _round_up(fo, LANE)
        wp = jnp.zeros((fip, fop), jnp.bfloat16).at[:fi, :fo].set(w.astype(jnp.bfloat16))
        bp = jnp.zeros((1, fop), jnp.float32).at[:, :fo].set(b)
        padded.append((wp, bp))
    return padded


@functools.partial(jax.jit, static_argnames=("tile_m", "num_layers"))
def _run_pallas(x_padded, flat_params, tile_m, num_layers):
    padded_batch, in_pad = x_padded.shape
    out_pad = flat_params[-1].shape[-1]
    grid = (padded_batch // tile_m,)

    in_specs = [pl.BlockSpec((tile_m, in_pad), lambda i: (i, 0))]
    for l in range(num_layers):
        w = flat_params[2 * l]
        b = flat_params[2 * l + 1]
        # Constant block index -> weight/bias stay resident in VMEM across the grid.
        in_specs.append(pl.BlockSpec(w.shape, lambda i: (0, 0)))
        in_specs.append(pl.BlockSpec(b.shape, lambda i: (0, 0)))
    out_spec = pl.BlockSpec((tile_m, out_pad), lambda i: (i, 0))

    flops = 2 * padded_batch * sum(
        flat_params[2 * l].shape[0] * flat_params[2 * l].shape[1]
        for l in range(num_layers))
    bytes_accessed = (x_padded.size * x_padded.dtype.itemsize
                      + sum(p.size * p.dtype.itemsize for p in flat_params)
                      + padded_batch * out_pad * 4)
    cost = pl.CostEstimate(flops=flops, transcendentals=0,
                           bytes_accessed=bytes_accessed)

    return pl.pallas_call(
        _make_mlp_kernel(num_layers),
        out_shape=jax.ShapeDtypeStruct((padded_batch, out_pad), jnp.float32),
        grid=grid,
        in_specs=in_specs,
        out_specs=out_spec,
        compiler_params=pltpu.CompilerParams(
            dimension_semantics=("parallel",),       # megacore / v7x 2-TC sharding
            vmem_limit_bytes=64 * 1024 * 1024,       # budget against v7x 64 MiB VMEM
        ),
        cost_estimate=cost,
    )(x_padded, *flat_params)
    # TODO(synk): if sum of padded weight bytes exceeds ~40 MiB (huge hidden sizes),
    # fall back to per-layer calls or a K-tiled accumulator variant instead of the
    # fully weight-resident fusion.


def mlp_forward(x, params, tile_m=DEFAULT_TILE_M):
    """Forward pass of DeepNeuralNetworkModel via a single fused, batch-tiled Pallas kernel."""
    batch, in_features = x.shape
    out_features = params[-1][0].shape[1]
    num_layers = len(params)

    padded = _pad_params(params)
    in_pad = padded[0][0].shape[0]

    if batch > tile_m:
        tm = tile_m
        padded_batch = _round_up(batch, tm)
    else:
        padded_batch = _round_up(batch, SUBLANE)
        tm = padded_batch

    x_p = jnp.zeros((padded_batch, in_pad), jnp.float32)
    x_p = x_p.at[:batch, :in_features].set(x.astype(jnp.float32))

    flat = []
    for (wp, bp) in padded:
        flat.append(wp)
        flat.append(bp)

    out_p = _run_pallas(x_p, tuple(flat), tile_m=tm, num_layers=num_layers)
    return out_p[:batch, :out_features]


def mlp_reference(x, params):
    """Pure-JAX reference mirroring the kernel's bf16-operand / f32-accumulate math."""
    h = x.astype(jnp.float32)
    for i, (w, b) in enumerate(params):
        w_bf = w.astype(jnp.bfloat16).astype(jnp.float32)
        h_bf = h.astype(jnp.bfloat16).astype(jnp.float32)
        h = h_bf @ w_bf + b
        if i < len(params) - 1:
            h = jnp.maximum(h, 0.0)
    return h


if __name__ == "__main__":
    key = jax.random.PRNGKey(0)

    # Shapes consistent with the module: batch tiled by 256 (grid of 2),
    # feature dims deliberately NOT 128-multiples to exercise the lane padding path.
    batch = 512
    input_size = 32
    units_per_layer = [32, 64, 48, 16]  # -> Linear(32,64)+ReLU, Linear(64,48)+ReLU, Linear(48,16)

    key, kx, kp = jax.random.split(key, 3)
    x = jax.random.normal(kx, (batch, input_size), dtype=jnp.float32)
    params = init_params(kp, input_size, units_per_layer)

    out = mlp_forward(x, params)
    out = jax.block_until_ready(out)

    ref = mlp_reference(x, params)
    assert out.shape == (batch, units_per_layer[-1]), out.shape
    assert jnp.allclose(out, ref, atol=2e-2, rtol=2e-2), "mismatch vs reference"

    print("KERNEL_OK")
</pallas_src>

<mosaic_0001>
module attributes {stable_mosaic.version = 11 : i64} {
  func.func @kernel(%arg0: i32, %arg1: memref<256x128xf32, #tpu.memory_space<vmem>>, %arg2: memref<128x128xbf16, #tpu.memory_space<vmem>>, %arg3: memref<1x128xf32, #tpu.memory_space<vmem>>, %arg4: memref<128x128xbf16, #tpu.memory_space<vmem>>, %arg5: memref<1x128xf32, #tpu.memory_space<vmem>>, %arg6: memref<128x128xbf16, #tpu.memory_space<vmem>>, %arg7: memref<1x128xf32, #tpu.memory_space<vmem>>, %arg8: memref<256x128xf32, #tpu.memory_space<vmem>>) attributes {dimension_semantics = [#tpu.dimension_semantics<parallel>], iteration_bounds = array<i64: 2>, scalar_prefetch = 0 : i64, scratch_operands = 0 : i64, tpu.core_type = #tpu.core_type<tc>, window_params = [{transform_indices = @transform_0, window_bounds = array<i64: 256, 128>}, {pipeline_mode = #tpu.pipeline_mode<synchronous>, transform_indices = @transform_1, window_bounds = array<i64: 128, 128>}, {pipeline_mode = #tpu.pipeline_mode<synchronous>, transform_indices = @transform_2, window_bounds = array<i64: 1, 128>}, {pipeline_mode = #tpu.pipeline_mode<synchronous>, transform_indices = @transform_3, window_bounds = array<i64: 128, 128>}, {pipeline_mode = #tpu.pipeline_mode<synchronous>, transform_indices = @transform_4, window_bounds = array<i64: 1, 128>}, {pipeline_mode = #tpu.pipeline_mode<synchronous>, transform_indices = @transform_5, window_bounds = array<i64: 128, 128>}, {pipeline_mode = #tpu.pipeline_mode<synchronous>, transform_indices = @transform_6, window_bounds = array<i64: 1, 128>}, {transform_indices = @transform_7, window_bounds = array<i64: 256, 128>}]} {
    %c0 = arith.constant 0 : index
    %c0_0 = arith.constant 0 : index
    %0 = vector.load %arg1[%c0, %c0_0] : memref<256x128xf32, #tpu.memory_space<vmem>>, vector<256x128xf32>
    %c0_1 = arith.constant 0 : index
    %c0_2 = arith.constant 0 : index
    %1 = vector.load %arg2[%c0_1, %c0_2] : memref<128x128xbf16, #tpu.memory_space<vmem>>, vector<128x128xbf16>
    %c0_3 = arith.constant 0 : index
    %c0_4 = arith.constant 0 : index
    %2 = vector.load %arg3[%c0_3, %c0_4] : memref<1x128xf32, #tpu.memory_space<vmem>>, vector<1x128xf32>
    %3 = arith.truncf %0 : vector<256x128xf32> to vector<256x128xbf16>
    %cst = arith.constant dense<0.000000e+00> : vector<256x128xf32>
    %4 = tpu.matmul %3, %1, %cst {dimension_numbers = #tpu.dot_dimension_numbers<[1], [0], [0], [1], [0, 0, 1, 1], [], []>} : vector<256x128xbf16>, vector<128x128xbf16>, vector<256x128xf32> -> vector<256x128xf32>
    %5 = vector.broadcast %2 : vector<1x128xf32> to vector<256x128xf32>
    %6 = arith.addf %4, %5 : vector<256x128xf32>
    %cst_5 = arith.constant 0.000000e+00 : f32
    %7 = vector.broadcast %cst_5 : f32 to vector<256x128xf32>
    %8 = arith.maximumf %6, %7 : vector<256x128xf32>
    %c0_6 = arith.constant 0 : index
    %c0_7 = arith.constant 0 : index
    %9 = vector.load %arg4[%c0_6, %c0_7] : memref<128x128xbf16, #tpu.memory_space<vmem>>, vector<128x128xbf16>
    %c0_8 = arith.constant 0 : index
    %c0_9 = arith.constant 0 : index
    %10 = vector.load %arg5[%c0_8, %c0_9] : memref<1x128xf32, #tpu.memory_space<vmem>>, vector<1x128xf32>
    %11 = arith.truncf %8 : vector<256x128xf32> to vector<256x128xbf16>
    %cst_10 = arith.constant dense<0.000000e+00> : vector<256x128xf32>
    %12 = tpu.matmul %11, %9, %cst_10 {dimension_numbers = #tpu.dot_dimension_numbers<[1], [0], [0], [1], [0, 0, 1, 1], [], []>} : vector<256x128xbf16>, vector<128x128xbf16>, vector<256x128xf32> -> vector<256x128xf32>
    %13 = vector.broadcast %10 : vector<1x128xf32> to vector<256x128xf32>
    %14 = arith.addf %12, %13 : vector<256x128xf32>
    %cst_11 = arith.constant 0.000000e+00 : f32
    %15 = vector.broadcast %cst_11 : f32 to vector<256x128xf32>
    %16 = arith.maximumf %14, %15 : vector<256x128xf32>
    %c0_12 = arith.constant 0 : index
    %c0_13 = arith.constant 0 : index
    %17 = vector.load %arg6[%c0_12, %c0_13] : memref<128x128xbf16, #tpu.memory_space<vmem>>, vector<128x128xbf16>
    %c0_14 = arith.constant 0 : index
    %c0_15 = arith.constant 0 : index
    %18 = vector.load %arg7[%c0_14, %c0_15] : memref<1x128xf32, #tpu.memory_space<vmem>>, vector<1x128xf32>
    %19 = arith.truncf %16 : vector<256x128xf32> to vector<256x128xbf16>
    %cst_16 = arith.constant dense<0.000000e+00> : vector<256x128xf32>
    %20 = tpu.matmul %19, %17, %cst_16 {dimension_numbers = #tpu.dot_dimension_numbers<[1], [0], [0], [1], [0, 0, 1, 1], [], []>} : vector<256x128xbf16>, vector<128x128xbf16>, vector<256x128xf32> -> vector<256x128xf32>
    %21 = vector.broadcast %18 : vector<1x128xf32> to vector<256x128xf32>
    %22 = arith.addf %20, %21 : vector<256x128xf32>
    %c0_17 = arith.constant 0 : index
    %c0_18 = arith.constant 0 : index
    %23 = vector.load %arg8[%c0_17, %c0_18] : memref<256x128xf32, #tpu.memory_space<vmem>>, vector<256x128xf32>
    tpu.vector_store %arg8[%c0_17, %c0_18], %22 {strides = array<i32>} : memref<256x128xf32, #tpu.memory_space<vmem>>, vector<256x128xf32>,
    return
  }
  func.func @transform_0(%arg0: i32) -> (i32, i32) {
    %c0_i32 = arith.constant 0 : i32
    %c0_i32_0 = arith.constant 0 : i32
    return %arg0, %c0_i32 : i32, i32
  }
  func.func @transform_1(%arg0: i32) -> (i32, i32) {
    %c0_i32 = arith.constant 0 : i32
    %c0_i32_0 = arith.constant 0 : i32
    %c0_i32_1 = arith.constant 0 : i32
    return %c0_i32, %c0_i32_0 : i32, i32
  }
  func.func @transform_2(%arg0: i32) -> (i32, i32) {
    %c0_i32 = arith.constant 0 : i32
    %c0_i32_0 = arith.constant 0 : i32
    %c0_i32_1 = arith.constant 0 : i32
    return %c0_i32, %c0_i32_0 : i32, i32
  }
  func.func @transform_3(%arg0: i32) -> (i32, i32) {
    %c0_i32 = arith.constant 0 : i32
    %c0_i32_0 = arith.constant 0 : i32
    %c0_i32_1 = arith.constant 0 : i32
    return %c0_i32, %c0_i32_0 : i32, i32
  }
  func.func @transform_4(%arg0: i32) -> (i32, i32) {
    %c0_i32 = arith.constant 0 : i32
    %c0_i32_0 = arith.constant 0 : i32
    %c0_i32_1 = arith.constant 0 : i32
    return %c0_i32, %c0_i32_0 : i32, i32
  }
  func.func @transform_5(%arg0: i32) -> (i32, i32) {
    %c0_i32 = arith.constant 0 : i32
    %c0_i32_0 = arith.constant 0 : i32
    %c0_i32_1 = arith.constant 0 : i32
    return %c0_i32, %c0_i32_0 : i32, i32
  }
  func.func @transform_6(%arg0: i32) -> (i32, i32) {
    %c0_i32 = arith.constant 0 : i32
    %c0_i32_0 = arith.constant 0 : i32
    %c0_i32_1 = arith.constant 0 : i32
    return %c0_i32, %c0_i32_0 : i32, i32
  }
  func.func @transform_7(%arg0: i32) -> (i32, i32) {
    %c0_i32 = arith.constant 0 : i32
    %c0_i32_0 = arith.constant 0 : i32
    return %arg0, %c0_i32 : i32, i32
  }
}

</mosaic_0001>

<llo_original>
// kernel: _run_pallas.1
$region0: #{_run_pallas.1}
  #allocation0 [shape = 'u32[]', space=smem, size = 0x4, offset = 0x4, fixed_abs, tag = 'smem constant byte address 0x4 - core index']
  #allocation1 [shape = 'u32[144,128]{1,0:T(1,128)}', space=vmem, size = 0x12000, scoped, tag = 'internal scratch']
  %s0 = inlined_call_operand.hbm [shape: f32[512,128], index: 0, kind: input, shape index: {}]
  %s1 = inlined_call_operand.hbm [shape: bf16[128,128], index: 1, kind: input, shape index: {}]
  %s2 = inlined_call_operand.hbm [shape: f32[1,128], index: 2, kind: input, shape index: {}]
  %s3 = inlined_call_operand.hbm [shape: bf16[128,128], index: 3, kind: input, shape index: {}]
  %s4 = inlined_call_operand.hbm [shape: f32[1,128], index: 4, kind: input, shape index: {}]
  %s5 = inlined_call_operand.hbm [shape: bf16[128,128], index: 5, kind: input, shape index: {}]
  %s6 = inlined_call_operand.hbm [shape: f32[1,128], index: 6, kind: input, shape index: {}]
  %s7 = inlined_call_operand.hbm [shape: f32[512,128], index: 7, kind: output, shape index: {}]
  %s8 = sld [smem:[#allocation0]]
  $region89: #{_run_pallas.1} parent=0
    _
  %s10 = ssub.s32 1, %s8
  %s11 = scalar_select 0, %s10, %s8
  $region1: #{_run_pallas.1} parent=0
    #allocation2 [shape = 'u8[262144]{0}', space=vmem, size = 0x40000, scoped, tag = 'input window, operand 0']
    #allocation3 [shape = 's32[2]{0}', space=sflag, size = 0x8, scoped, tag = 'scoped memory for _run_pallas.1']
    #allocation4 [shape = 's32[2]{0}', space=sflag, size = 0x8, scoped, tag = 'scoped memory for _run_pallas.1']
    #allocation5 [shape = 'u8[32768]{0}', space=vmem, size = 0x8000, scoped, tag = 'input window, operand 1, single buffered']
    #allocation6 [shape = 's32[1]{0}', space=sflag, size = 0x4, scoped, tag = 'scoped memory for _run_pallas.1']
    #allocation7 [shape = 'u8[512]{0}', space=vmem, size = 0x400, scoped, tag = 'input window, operand 2, single buffered']
    #allocation8 [shape = 'u8[32768]{0}', space=vmem, size = 0x8000, scoped, tag = 'input window, operand 3, single buffered']
    #allocation9 [shape = 's32[1]{0}', space=sflag, size = 0x4, scoped, tag = 'scoped memory for _run_pallas.1']
    #allocation10 [shape = 'u8[512]{0}', space=vmem, size = 0x400, scoped, tag = 'input window, operand 4, single buffered']
    #allocation11 [shape = 'u8[32768]{0}', space=vmem, size = 0x8000, scoped, tag = 'input window, operand 5, single buffered']
    #allocation12 [shape = 's32[1]{0}', space=sflag, size = 0x4, scoped, tag = 'scoped memory for _run_pallas.1']
    #allocation13 [shape = 'u8[512]{0}', space=vmem, size = 0x400, scoped, tag = 'input window, operand 6, single buffered']
    #allocation14 [shape = 'u8[262144]{0}', space=vmem, size = 0x40000, scoped, tag = 'output window, operand 0']
    %12 = vsyncpa [#allocation3], 0
    %s13 = scalar_lea.sflag [#allocation3], 1
    %14 = vsyncpa %s13, 0
    %15 = vsyncpa [#allocation6], 0
    %16 = vsyncpa [#allocation9], 0
    %17 = vsyncpa [#allocation12], 0
    %18 = vsyncpa [#allocation4], 0
    %s19 = scalar_lea.sflag [#allocation4], 1
    %20 = vsyncpa %s19, 0
    loop: start=0, step=1, limit=4
    $region2: #{_run_pallas.1} parent=1 // loop_pre_header
      _
    $region3: #{_run_pallas.1} parent=1 // loop_header
      %s22 = sphi 0, %s26
      %p23 = scmp.ge.s32.totalorder %s22, 4
      %s32 = sphi 0, %s34
      %s35 = sphi 0, %s32
      %s36 = sphi 0, %s35
      %s52 = sphi 0, %s36
      %s56 = sphi 0, %s56
      %s58 = sphi 0, %s56
      %s59 = sphi 0, %s58
      %s73 = sphi 0, %s59
      %s77 = sphi 0, %s77
      %s79 = sphi 0, %s77
      %s80 = sphi 0, %s79
      %s94 = sphi 0, %s80
      %s98 = sphi 0, %s98
      %s100 = sphi 0, %s98
      %s101 = sphi 0, %s100
      %s115 = sphi 0, %s101
      %s119 = sphi 0, %s119
      %s121 = sphi 0, %s119
      %s122 = sphi 0, %s121
      %s136 = sphi 0, %s122
      %s140 = sphi 0, %s140
      %s142 = sphi 0, %s140
      %s143 = sphi 0, %s142
      %s157 = sphi 0, %s143
      %s161 = sphi 0, %s161
      %s163 = sphi 0, %s161
      %s164 = sphi 0, %s163
      %s178 = sphi 0, %s164
      %s184 = sphi 0, %s186
      %s187 = sphi 0, %s184
      %s188 = sphi 0, %s187
      %s204 = sphi 0, %s188
    $region4: #{_run_pallas.1} parent=1 // loop_header_branch
      %25 = sbr.rel (%p23) target = $region8
    $region5: #{_run_pallas.1} parent=1 // loop_body
      %s27 = ssub.s32 %s22, 1
      %s28 = ssub.s32 %s22, 2
      %s29 = sadd.s32 %s22, 1
      %s30 = ssub.s32 %s22, %s29
      %p31 = scmp.eq.s32.totalorder %s30, 0
      %s33 = sadd.s32 %s32, 1
      %s34 = scalar_select %p31, %s32, %s33
      %p37 = pneg %p31
      %p38 = scmp.eq.s32.totalorder %s22, 1
      %p39 = por %p37, %p38
      %p40 = scmp.ne.s32.totalorder %s32, %s35
      %p41 = scmp.eq.s32.totalorder %s22, 0
      %p42 = por %p40, %p41
      %p43 = scmp.ne.s32.totalorder %s32, %s35
      %p44 = scmp.eq.s32.totalorder %s27, 1
      %p45 = por %p43, %p44
      %p46 = scmp.ne.s32.totalorder %s35, %s36
      %p47 = scmp.eq.s32.totalorder %s27, 0
      %p48 = por %p46, %p47
      %p49 = scmp.ne.s32.totalorder %s35, %s36
      %p50 = scmp.eq.s32.totalorder %s28, 1
      %p51 = por %p49, %p50
      %p53 = scmp.ne.s32.totalorder %s36, %s52
      %p54 = scmp.eq.s32.totalorder %s28, 0
      %p55 = por %p53, %p54
      %s57 = sadd.s32 %s56, 1
      %p60 = scmp.eq.s32.totalorder %s22, 1
      %p61 = scmp.ne.s32.totalorder %s56, %s58
      %p62 = scmp.eq.s32.totalorder %s22, 0
      %p63 = por %p61, %p62
      %p64 = scmp.ne.s32.totalorder %s56, %s58
      %p65 = scmp.eq.s32.totalorder %s27, 1
      %p66 = por %p64, %p65
      %p67 = scmp.ne.s32.totalorder %s58, %s59
      %p68 = scmp.eq.s32.totalorder %s27, 0
      %p69 = por %p67, %p68
      %p70 = scmp.ne.s32.totalorder %s58, %s59
      %p71 = scmp.eq.s32.totalorder %s28, 1
      %p72 = por %p70, %p71
      %p74 = scmp.ne.s32.totalorder %s59, %s73
      %p75 = scmp.eq.s32.totalorder %s28, 0
      %p76 = por %p74, %p75
      %s78 = sadd.s32 %s77, 1
      %p81 = scmp.eq.s32.totalorder %s22, 1
      %p82 = scmp.ne.s32.totalorder %s77, %s79
      %p83 = scmp.eq.s32.totalorder %s22, 0
      %p84 = por %p82, %p83
      %p85 = scmp.ne.s32.totalorder %s77, %s79
      %p86 = scmp.eq.s32.totalorder %s27, 1
      %p87 = por %p85, %p86
      %p88 = scmp.ne.s32.totalorder %s79, %s80
      %p89 = scmp.eq.s32.totalorder %s27, 0
      %p90 = por %p88, %p89
      %p91 = scmp.ne.s32.totalorder %s79, %s80
      %p92 = scmp.eq.s32.totalorder %s28, 1
      %p93 = por %p91, %p92
      %p95 = scmp.ne.s32.totalorder %s80, %s94
      %p96 = scmp.eq.s32.totalorder %s28, 0
      %p97 = por %p95, %p96
      %s99 = sadd.s32 %s98, 1
      %p102 = scmp.eq.s32.totalorder %s22, 1
      %p103 = scmp.ne.s32.totalorder %s98, %s100
      %p104 = scmp.eq.s32.totalorder %s22, 0
      %p105 = por %p103, %p104
      %p106 = scmp.ne.s32.totalorder %s98, %s100
      %p107 = scmp.eq.s32.totalorder %s27, 1
      %p108 = por %p106, %p107
      %p109 = scmp.ne.s32.totalorder %s100, %s101
      %p110 = scmp.eq.s32.totalorder %s27, 0
      %p111 = por %p109, %p110
      %p112 = scmp.ne.s32.totalorder %s100, %s101
      %p113 = scmp.eq.s32.totalorder %s28, 1
      %p114 = por %p112, %p113
      %p116 = scmp.ne.s32.totalorder %s101, %s115
      %p117 = scmp.eq.s32.totalorder %s28, 0
      %p118 = por %p116, %p117
      %s120 = sadd.s32 %s119, 1
      %p123 = scmp.eq.s32.totalorder %s22, 1
      %p124 = scmp.ne.s32.totalorder %s119, %s121
      %p125 = scmp.eq.s32.totalorder %s22, 0
      %p126 = por %p124, %p125
      %p127 = scmp.ne.s32.totalorder %s119, %s121
      %p128 = scmp.eq.s32.totalorder %s27, 1
      %p129 = por %p127, %p128
      %p130 = scmp.ne.s32.totalorder %s121, %s122
      %p131 = scmp.eq.s32.totalorder %s27, 0
      %p132 = por %p130, %p131
      %p133 = scmp.ne.s32.totalorder %s121, %s122
      %p134 = scmp.eq.s32.totalorder %s28, 1
      %p135 = por %p133, %p134
      %p137 = scmp.ne.s32.totalorder %s122, %s136
      %p138 = scmp.eq.s32.totalorder %s28, 0
      %p139 = por %p137, %p138
      %s141 = sadd.s32 %s140, 1
      %p144 = scmp.eq.s32.totalorder %s22, 1
      %p145 = scmp.ne.s32.totalorder %s140, %s142
      %p146 = scmp.eq.s32.totalorder %s22, 0
      %p147 = por %p145, %p146
      %p148 = scmp.ne.s32.totalorder %s140, %s142
      %p149 = scmp.eq.s32.totalorder %s27, 1
      %p150 = por %p148, %p149
      %p151 = scmp.ne.s32.totalorder %s142, %s143
      %p152 = scmp.eq.s32.totalorder %s27, 0
      %p153 = por %p151, %p152
      %p154 = scmp.ne.s32.totalorder %s142, %s143
      %p155 = scmp.eq.s32.totalorder %s28, 1
      %p156 = por %p154, %p155
      %p158 = scmp.ne.s32.totalorder %s143, %s157
      %p159 = scmp.eq.s32.totalorder %s28, 0
      %p160 = por %p158, %p159
      %s162 = sadd.s32 %s161, 1
      %p165 = scmp.eq.s32.totalorder %s22, 1
      %p166 = scmp.ne.s32.totalorder %s161, %s163
      %p167 = scmp.eq.s32.totalorder %s22, 0
      %p168 = por %p166, %p167
      %p169 = scmp.ne.s32.totalorder %s161, %s163
      %p170 = scmp.eq.s32.totalorder %s27, 1
      %p171 = por %p169, %p170
      %p172 = scmp.ne.s32.totalorder %s163, %s164
      %p173 = scmp.eq.s32.totalorder %s27, 0
      %p174 = por %p172, %p173
      %p175 = scmp.ne.s32.totalorder %s163, %s164
      %p176 = scmp.eq.s32.totalorder %s28, 1
      %p177 = por %p175, %p176
      %p179 = scmp.ne.s32.totalorder %s164, %s178
      %p180 = scmp.eq.s32.totalorder %s28, 0
      %p181 = por %p179, %p180
      %s182 = ssub.s32 %s22, %s29
      %p183 = scmp.eq.s32.totalorder %s182, 0
      %s185 = sadd.s32 %s184, 1
      %s186 = scalar_select %p183, %s184, %s185
      %p189 = pneg %p183
      %p190 = scmp.eq.s32.totalorder %s22, 1
      %p191 = por %p189, %p190
      %p192 = scmp.ne.s32.totalorder %s184, %s187
      %p193 = scmp.eq.s32.totalorder %s22, 0
      %p194 = por %p192, %p193
      %p195 = scmp.ne.s32.totalorder %s184, %s187
      %p196 = scmp.eq.s32.totalorder %s27, 1
      %p197 = por %p195, %p196
      %p198 = scmp.ne.s32.totalorder %s187, %s188
      %p199 = scmp.eq.s32.totalorder %s27, 0
      %p200 = por %p198, %p199
      %p201 = scmp.ne.s32.totalorder %s187, %s188
      %p202 = scmp.eq.s32.totalorder %s28, 1
      %p203 = por %p201, %p202
      %p205 = scmp.ne.s32.totalorder %s188, %s204
      %p206 = scmp.eq.s32.totalorder %s28, 0
      %p207 = por %p205, %p206
      %p208 = scmp.le.s32.totalorder 1, %s22
      %p209 = scmp.lt.s32.totalorder %s22, 3
      %p210 = pnand %p208, %p209
      %p211 = pneg %p210
      // Predicated region
      $region9: #{_run_pallas.1} parent=5 // pred_check
        _
      $region10: #{_run_pallas.1} parent=5 // pred_check_branch
        %213 = sbr.rel (%p210) target = $region12
      $region11: #{_run_pallas.1} parent=5 // pred_region
        %s214 = ssub.s32 %s22, 1
        // Predicated region
        $region13: #{_run_pallas.1} parent=11 // pred_check
          %p215 = pneg %p69
        $region14: #{_run_pallas.1} parent=11 // pred_check_branch
          %217 = sbr.rel (%p215) target = $region16
        $region15: #{_run_pallas.1} parent=11 // pred_region
          %s219 = ssub.s32 1024, 1024
          %220 = vsyncadd [#allocation6], %s219
          %s221 = sshll.u32 [#allocation5], 4
          %s222 = int_to_ptr.vmem [resolvable:$true] %s221
          %227 = dma.hbm_to_vmem [thread:$0]  %s1, 1024, %s222, [#allocation6], 64, 64, 4
        $region16: #{_run_pallas.1} parent=11 // pred_fallthru
          _
        // Predicated region
        $region17: #{_run_pallas.1} parent=11 // pred_check
          %p228 = pneg %p90
        $region18: #{_run_pallas.1} parent=11 // pred_check_branch
          %230 = sbr.rel (%p228) target = $region20
        $region19: #{_run_pallas.1} parent=11 // pred_region
          %s232 = ssub.s32 16, 16
          %233 = vsyncadd [#allocation6], %s232
          %s235 = sshll.u32 [#allocation7], 4
          %s236 = int_to_ptr.vmem [resolvable:$true] %s235
          %238 = dma.hbm_to_vmem [thread:$0]  %s2, 16, %s236, [#allocation6]
        $region20: #{_run_pallas.1} parent=11 // pred_fallthru
          _
        // Predicated region
        $region21: #{_run_pallas.1} parent=11 // pred_check
          %p239 = pneg %p111
        $region22: #{_run_pallas.1} parent=11 // pred_check_branch
          %241 = sbr.rel (%p239) target = $region24
        $region23: #{_run_pallas.1} parent=11 // pred_region
          %s243 = ssub.s32 1024, 1024
          %244 = vsyncadd [#allocation9], %s243
          %s245 = sshll.u32 [#allocation8], 4
          %s246 = int_to_ptr.vmem [resolvable:$true] %s245
          %251 = dma.hbm_to_vmem [thread:$0]  %s3, 1024, %s246, [#allocation9], 64, 64, 4
        $region24: #{_run_pallas.1} parent=11 // pred_fallthru
          _
        // Predicated region
        $region25: #{_run_pallas.1} parent=11 // pred_check
          %p252 = pneg %p132
        $region26: #{_run_pallas.1} parent=11 // pred_check_branch
          %254 = sbr.rel (%p252) target = $region28
        $region27: #{_run_pallas.1} parent=11 // pred_region
          %s256 = ssub.s32 16, 16
          %257 = vsyncadd [#allocation9], %s256
          %s259 = sshll.u32 [#allocation10], 4
          %s260 = int_to_ptr.vmem [resolvable:$true] %s259
          %262 = dma.hbm_to_vmem [thread:$0]  %s4, 16, %s260, [#allocation9]
        $region28: #{_run_pallas.1} parent=11 // pred_fallthru
          _
        // Predicated region
        $region29: #{_run_pallas.1} parent=11 // pred_check
          %p263 = pneg %p153
        $region30: #{_run_pallas.1} parent=11 // pred_check_branch
          %265 = sbr.rel (%p263) target = $region32
        $region31: #{_run_pallas.1} parent=11 // pred_region
          %s267 = ssub.s32 1024, 1024
          %268 = vsyncadd [#allocation12], %s267
          %s269 = sshll.u32 [#allocation11], 4
          %s270 = int_to_ptr.vmem [resolvable:$true] %s269
          %275 = dma.hbm_to_vmem [thread:$0]  %s5, 1024, %s270, [#allocation12], 64, 64, 4
        $region32: #{_run_pallas.1} parent=11 // pred_fallthru
          _
        // Predicated region
        $region33: #{_run_pallas.1} parent=11 // pred_check
          %p276 = pneg %p174
        $region34: #{_run_pallas.1} parent=11 // pred_check_branch
          %278 = sbr.rel (%p276) target = $region36
        $region35: #{_run_pallas.1} parent=11 // pred_region
          %s280 = ssub.s32 16, 16
          %281 = vsyncadd [#allocation12], %s280
          %s283 = sshll.u32 [#allocation13], 4
          %s284 = int_to_ptr.vmem [resolvable:$true] %s283
          %286 = dma.hbm_to_vmem [thread:$0]  %s6, 16, %s284, [#allocation12]
        $region36: #{_run_pallas.1} parent=11 // pred_fallthru
          _
      $region12: #{_run_pallas.1} parent=5 // pred_fallthru
        _
      %p287 = scmp.lt.s32.totalorder %s22, 2
      // Predicated region
      $region37: #{_run_pallas.1} parent=5 // pred_check
        %p288 = pneg %p287
      $region38: #{_run_pallas.1} parent=5 // pred_check_branch
        %290 = sbr.rel (%p288) target = $region40
      $region39: #{_run_pallas.1} parent=5 // pred_region
        // Predicated region
        $region41: #{_run_pallas.1} parent=39 // pred_check
          %p291 = pneg %p42
        $region42: #{_run_pallas.1} parent=39 // pred_check_branch
          %293 = sbr.rel (%p291) target = $region44
        $region43: #{_run_pallas.1} parent=39 // pred_region
          %s294 = sand.u32 %s32, 1
          %s295 = scalar_lea.sflag [#allocation3], %s294
          %s296 = sand.u32 %s32, 1
          %s297 = smul.addr %s296, 256
          %s298 = scalar_lea.vmem [#allocation2], %s297
          %s299 = smul.u32 32, %s22
          %s301 = ssub.s32 4096, 4096
          %302 = vsyncadd %s295, %s301
          %s303 = smul.addr %s299, 128
          %s304 = scalar_lea.hbm %s0, %s303
          %s305 = sshll.u32 %s298, 4
          %s306 = int_to_ptr.vmem [resolvable:$true] %s305
          %311 = dma.hbm_to_vmem [thread:$0]  %s304, 4096, %s306, %s295, 128, 128, 8
        $region44: #{_run_pallas.1} parent=39 // pred_fallthru
          _
      $region40: #{_run_pallas.1} parent=5 // pred_fallthru
        _
      %p312 = scmp.le.s32.totalorder 1, %s22
      %p313 = scmp.lt.s32.totalorder %s22, 3
      %p314 = pnand %p312, %p313
      %p315 = pneg %p314
      // Predicated region
      $region45: #{_run_pallas.1} parent=5 // pred_check
        _
      $region46: #{_run_pallas.1} parent=5 // pred_check_branch
        %317 = sbr.rel (%p314) target = $region48
      $region47: #{_run_pallas.1} parent=5 // pred_region
        %s318 = ssub.s32 %s22, 1
        %s319 = sand.u32 %s35, 1
        %s320 = scalar_lea.sflag [#allocation3], %s319
        %s321 = sand.u32 %s35, 1
        %s322 = smul.addr %s321, 256
        %s323 = scalar_lea.vmem [#allocation2], %s322
        // Predicated region
        $region49: #{_run_pallas.1} parent=47 // pred_check
          %p324 = pneg %p48
        $region50: #{_run_pallas.1} parent=47 // pred_check_branch
          %326 = sbr.rel (%p324) target = $region52
        $region51: #{_run_pallas.1} parent=47 // pred_region
          %327 = dma.done %s320, 4096
        $region52: #{_run_pallas.1} parent=47 // pred_fallthru
          _
        // Predicated region
        $region53: #{_run_pallas.1} parent=47 // pred_check
          %p328 = pneg %p69
        $region54: #{_run_pallas.1} parent=47 // pred_check_branch
          %330 = sbr.rel (%p328) target = $region56
        $region55: #{_run_pallas.1} parent=47 // pred_region
          %331 = dma.done [#allocation6], 1024
        $region56: #{_run_pallas.1} parent=47 // pred_fallthru
          _
        // Predicated region
        $region57: #{_run_pallas.1} parent=47 // pred_check
          %p332 = pneg %p90
        $region58: #{_run_pallas.1} parent=47 // pred_check_branch
          %334 = sbr.rel (%p332) target = $region60
        $region59: #{_run_pallas.1} parent=47 // pred_region
          %335 = dma.done [#allocation6], 16
        $region60: #{_run_pallas.1} parent=47 // pred_fallthru
          _
        // Predicated region
        $region61: #{_run_pallas.1} parent=47 // pred_check
          %p336 = pneg %p111
        $region62: #{_run_pallas.1} parent=47 // pred_check_branch
          %338 = sbr.rel (%p336) target = $region64
        $region63: #{_run_pallas.1} parent=47 // pred_region
          %339 = dma.done [#allocation9], 1024
        $region64: #{_run_pallas.1} parent=47 // pred_fallthru
          _
        // Predicated region
        $region65: #{_run_pallas.1} parent=47 // pred_check
          %p340 = pneg %p132
        $region66: #{_run_pallas.1} parent=47 // pred_check_branch
          %342 = sbr.rel (%p340) target = $region68
        $region67: #{_run_pallas.1} parent=47 // pred_region
          %343 = dma.done [#allocation9], 16
        $region68: #{_run_pallas.1} parent=47 // pred_fallthru
          _
        // Predicated region
        $region69: #{_run_pallas.1} parent=47 // pred_check
          %p344 = pneg %p153
        $region70: #{_run_pallas.1} parent=47 // pred_check_branch
          %346 = sbr.rel (%p344) target = $region72
        $region71: #{_run_pallas.1} parent=47 // pred_region
          %347 = dma.done [#allocation12], 1024
        $region72: #{_run_pallas.1} parent=47 // pred_fallthru
          _
        // Predicated region
        $region73: #{_run_pallas.1} parent=47 // pred_check
          %p348 = pneg %p174
        $region74: #{_run_pallas.1} parent=47 // pred_check_branch
          %350 = sbr.rel (%p348) target = $region76
        $region75: #{_run_pallas.1} parent=47 // pred_region
          %351 = dma.done [#allocation12], 16
        $region76: #{_run_pallas.1} parent=47 // pred_fallthru
          _
        %s352 = sand.u32 %s35, 1
        %s353 = scalar_lea.sflag [#allocation3], %s352
        %s354 = sand.u32 %s35, 1
        %s355 = smul.addr %s354, 256
        %s356 = scalar_lea.vmem [#allocation2], %s355
        %p357 = pneg %p48
        %p358 = pneg %p45
        %p359 = pneg %p69
        %p360 = pneg %p66
        %p361 = pneg %p90
        %p362 = pneg %p87
        %p363 = pneg %p111
        %p364 = pneg %p108
        %p365 = pneg %p132
        %p366 = pneg %p129
        %p367 = pneg %p153
        %p368 = pneg %p150
        %p369 = pneg %p174
        %p370 = pneg %p171
        %p371 = pneg %p200
        %p372 = pneg %p197
        %s373 = sand.u32 %s187, 1
        %s374 = scalar_lea.sflag [#allocation4], %s373
        %s375 = sand.u32 %s187, 1
        %s376 = smul.addr %s375, 256
        %s377 = scalar_lea.vmem [#allocation14], %s376
        %s378 = smul.u32 32, %s27
        %s379 = smul.u32 32, %s27
        %v381 = vld [vmem:[%s323] sm:$0xff]
        %v382 = vld [vmem:[%s323 + $0x8] sm:$0xff]
        %v383 = vld [vmem:[%s323 + $0x10] sm:$0xff]
        %v384 = vld [vmem:[%s323 + $0x18] sm:$0xff]
        %v385 = vld [vmem:[%s323 + $0x20] sm:$0xff]
        %v386 = vld [vmem:[%s323 + $0x28] sm:$0xff]
        %v387 = vld [vmem:[%s323 + $0x30] sm:$0xff]
        %v388 = vld [vmem:[%s323 + $0x38] sm:$0xff]
        %v389 = vld [vmem:[%s323 + $0x40] sm:$0xff]
        %v390 = vld [vmem:[%s323 + $0x48] sm:$0xff]
        %v391 = vld [vmem:[%s323 + $0x50] sm:$0xff]
        %v392 = vld [vmem:[%s323 + $0x58] sm:$0xff]
        %v393 = vld [vmem:[%s323 + $0x60] sm:$0xff]
        %v394 = vld [vmem:[%s323 + $0x68] sm:$0xff]
        %v395 = vld [vmem:[%s323 + $0x70] sm:$0xff]
        %v396 = vld [vmem:[%s323 + $0x78] sm:$0xff]
        %v397 = vld [vmem:[%s323 + $0x80] sm:$0xff]
        %v398 = vld [vmem:[%s323 + $0x88] sm:$0xff]
        %v399 = vld [vmem:[%s323 + $0x90] sm:$0xff]
        %v400 = vld [vmem:[%s323 + $0x98] sm:$0xff]
        %v401 = vld [vmem:[%s323 + $0xa0] sm:$0xff]
        %v402 = vld [vmem:[%s323 + $0xa8] sm:$0xff]
        %v403 = vld [vmem:[%s323 + $0xb0] sm:$0xff]
        %v404 = vld [vmem:[%s323 + $0xb8] sm:$0xff]
        %v405 = vld [vmem:[%s323 + $0xc0] sm:$0xff]
        %v406 = vld [vmem:[%s323 + $0xc8] sm:$0xff]
        %v407 = vld [vmem:[%s323 + $0xd0] sm:$0xff]
        %v408 = vld [vmem:[%s323 + $0xd8] sm:$0xff]
        %v409 = vld [vmem:[%s323 + $0xe0] sm:$0xff]
        %v410 = vld [vmem:[%s323 + $0xe8] sm:$0xff]
        %v411 = vld [vmem:[%s323 + $0xf0] sm:$0xff]
        %v412 = vld [vmem:[%s323 + $0xf8] sm:$0xff]
        %v413 = vld [vmem:[#allocation5] sm:$0xf]
        %v414 = vld [vmem:[#allocation5 + $0x4] sm:$0xf]
        %v415 = vld [vmem:[#allocation5 + $0x8] sm:$0xf]
        %v416 = vld [vmem:[#allocation5 + $0xc] sm:$0xf]
        %v417 = vld [vmem:[#allocation5 + $0x10] sm:$0xf]
        %v418 = vld [vmem:[#allocation5 + $0x14] sm:$0xf]
        %v419 = vld [vmem:[#allocation5 + $0x18] sm:$0xf]
        %v420 = vld [vmem:[#allocation5 + $0x1c] sm:$0xf]
        %v421 = vld [vmem:[#allocation5 + $0x20] sm:$0xf]
        %v422 = vld [vmem:[#allocation5 + $0x24] sm:$0xf]
        %v423 = vld [vmem:[#allocation5 + $0x28] sm:$0xf]
        %v424 = vld [vmem:[#allocation5 + $0x2c] sm:$0xf]
        %v425 = vld [vmem:[#allocation5 + $0x30] sm:$0xf]
        %v426 = vld [vmem:[#allocation5 + $0x34] sm:$0xf]
        %v427 = vld [vmem:[#allocation5 + $0x38] sm:$0xf]
        %v428 = vld [vmem:[#allocation5 + $0x3c] sm:$0xf]
        %v429 = vld [vmem:[#allocation7] sm:$0x1]
        %v430 = vpack.c.bf16 %v382, %v381
        %v431 = vpack.c.bf16 %v384, %v383
        %v432 = vpack.c.bf16 %v386, %v385
        %v433 = vpack.c.bf16 %v388, %v387
        %v434 = vpack.c.bf16 %v390, %v389
        %v435 = vpack.c.bf16 %v392, %v391
        %v436 = vpack.c.bf16 %v394, %v393
        %v437 = vpack.c.bf16 %v396, %v395
        %v438 = vpack.c.bf16 %v398, %v397
        %v439 = vpack.c.bf16 %v400, %v399
        %v440 = vpack.c.bf16 %v402, %v401
        %v441 = vpack.c.bf16 %v404, %v403
        %v442 = vpack.c.bf16 %v406, %v405
        %v443 = vpack.c.bf16 %v408, %v407
        %v444 = vpack.c.bf16 %v410, %v409
        %v445 = vpack.c.bf16 %v412, %v411
        %v447 = vlaneseq
        %v448 = vshrl.u32 %v447, 7
        %v449 = vsub.s32 0, %v448
        %v450 = vrot.slane %v429, %v449
        %v468 = vunpack.c.l.b16 %v413
        %v469 = vunpack.c.l.b16 %v414
        %v470 = vunpack.c.l.b16 %v415
        %v471 = vunpack.c.l.b16 %v416
        %v472 = vunpack.c.l.b16 %v417
        %v473 = vunpack.c.l.b16 %v418
        %v474 = vunpack.c.l.b16 %v419
        %v475 = vunpack.c.l.b16 %v420
        %v476 = vunpack.c.l.b16 %v421
        %v477 = vunpack.c.l.b16 %v422
        %v478 = vunpack.c.l.b16 %v423
        %v479 = vunpack.c.l.b16 %v424
        %v480 = vunpack.c.l.b16 %v425
        %v481 = vunpack.c.l.b16 %v426
        %v482 = vunpack.c.l.b16 %v427
        %v483 = vunpack.c.l.b16 %v428
        %v484 = vpack.c.b16 %v469, %v468
        %v485 = vpack.c.b16 %v471, %v470
        %v486 = vpack.c.b16 %v473, %v472
        %v487 = vpack.c.b16 %v475, %v474
        %v488 = vpack.c.b16 %v477, %v476
        %v489 = vpack.c.b16 %v479, %v478
        %v490 = vpack.c.b16 %v481, %v480
        %v491 = vpack.c.b16 %v483, %v482
        %500 = vmatprep.subr.bf16.mxu0 0
        %501 = vmatpush1.bf16.msra.mxu0 %v484
        %502 = vmatprep.subr.bf16.mxu0 0
        %503 = vmatpush1.bf16.msra.mxu0 %v485
        %504 = vmatprep.subr.bf16.mxu0 0
        %505 = vmatpush1.bf16.msra.mxu0 %v486
        %506 = vmatprep.subr.bf16.mxu0 0
        %507 = vmatpush1.bf16.msra.mxu0 %v487
        %508 = vmatprep.subr.bf16.mxu0 0
        %509 = vmatpush1.bf16.msra.mxu0 %v488
        %510 = vmatprep.subr.bf16.mxu0 0
        %511 = vmatpush1.bf16.msra.mxu0 %v489
        %512 = vmatprep.subr.bf16.mxu0 0
        %513 = vmatpush1.bf16.msra.mxu0 %v490
        %514 = vmatprep.subr.bf16.mxu0 0
        %515 = vmatpush1.bf16.msra.mxu0 %v491
        %516 = vmatprep.subr.bf16.mxu0 0
        %517 = vmatpush1.bf16.msra.mxu0 0
        %518 = vmatprep.subr.bf16.mxu0 0
        %519 = vmatpush1.bf16.msra.mxu0 0
        %520 = vmatprep.subr.bf16.mxu0 0
        %521 = vmatpush1.bf16.msra.mxu0 0
        %522 = vmatprep.subr.bf16.mxu0 0
        %523 = vmatpush1.bf16.msra.mxu0 0
        %524 = vmatprep.subr.bf16.mxu0 0
        %525 = vmatpush1.bf16.msra.mxu0 0
        %526 = vmatprep.subr.bf16.mxu0 0
        %527 = vmatpush1.bf16.msra.mxu0 0
        %528 = vmatprep.subr.bf16.mxu0 0
        %529 = vmatpush1.bf16.msra.mxu0 0
        %530 = vmatprep.subr.bf16.mxu0 0
        %531 = vmatpush1.bf16.msra.mxu0 0
        %532 = vmatprep.mubr.bf16.mxu0 0
        %533 = vmatmul.mubr.bf16.gmra.mrb[0].mxu0 %v430
        %v534 = vpop.f32.mrb[0].mxu0
        %v535 = vadd.f32 %v450, %v534
        %v536 = vpop.f32.mrb[0].mxu0
        %v537 = vpop.f32.mrb[0].mxu0
        %v538 = vadd.f32 %v450, %v537
        %v539 = vpop.f32.mrb[0].mxu0
        %540 = vmatprep.mubr.bf16.mxu0 0
        %541 = vmatmul.mubr.bf16.gmra.mrb[0].mxu0 %v431
        %v542 = vpop.f32.mrb[0].mxu0
        %v543 = vadd.f32 %v450, %v542
        %v544 = vpop.f32.mrb[0].mxu0
        %v545 = vpop.f32.mrb[0].mxu0
        %v546 = vadd.f32 %v450, %v545
        %v547 = vpop.f32.mrb[0].mxu0
        %548 = vmatprep.mubr.bf16.mxu0 0
        %549 = vmatmul.mubr.bf16.gmra.mrb[0].mxu0 %v432
        %v550 = vpop.f32.mrb[0].mxu0
        %v551 = vadd.f32 %v450, %v550
        %v552 = vpop.f32.mrb[0].mxu0
        %v553 = vpop.f32.mrb[0].mxu0
        %v554 = vadd.f32 %v450, %v553
        %v555 = vpop.f32.mrb[0].mxu0
        %556 = vmatprep.mubr.bf16.mxu0 0
        %557 = vmatmul.mubr.bf16.gmra.mrb[0].mxu0 %v433
        %v558 = vpop.f32.mrb[0].mxu0
        %v559 = vadd.f32 %v450, %v558
        %v560 = vpop.f32.mrb[0].mxu0
        %v561 = vpop.f32.mrb[0].mxu0
        %v562 = vadd.f32 %v450, %v561
        %v563 = vpop.f32.mrb[0].mxu0
        %564 = vmatprep.mubr.bf16.mxu0 0
        %565 = vmatmul.mubr.bf16.gmra.mrb[0].mxu0 %v434
        %v566 = vpop.f32.mrb[0].mxu0
        %v567 = vadd.f32 %v450, %v566
        %v568 = vpop.f32.mrb[0].mxu0
        %v569 = vpop.f32.mrb[0].mxu0
        %v570 = vadd.f32 %v450, %v569
        %v571 = vpop.f32.mrb[0].mxu0
        %572 = vmatprep.mubr.bf16.mxu0 0
        %573 = vmatmul.mubr.bf16.gmra.mrb[0].mxu0 %v435
        %v574 = vpop.f32.mrb[0].mxu0
        %v575 = vadd.f32 %v450, %v574
        %v576 = vpop.f32.mrb[0].mxu0
        %v577 = vpop.f32.mrb[0].mxu0
        %v578 = vadd.f32 %v450, %v577
        %v579 = vpop.f32.mrb[0].mxu0
        %580 = vmatprep.mubr.bf16.mxu0 0
        %581 = vmatmul.mubr.bf16.gmra.mrb[0].mxu0 %v436
        %v582 = vpop.f32.mrb[0].mxu0
        %v583 = vadd.f32 %v450, %v582
        %v584 = vpop.f32.mrb[0].mxu0
        %v585 = vpop.f32.mrb[0].mxu0
        %v586 = vadd.f32 %v450, %v585
        %v587 = vpop.f32.mrb[0].mxu0
        %588 = vmatprep.mubr.bf16.mxu0 0
        %589 = vmatmul.mubr.bf16.gmra.mrb[0].mxu0 %v437
        %v590 = vpop.f32.mrb[0].mxu0
        %v591 = vadd.f32 %v450, %v590
        %v592 = vpop.f32.mrb[0].mxu0
        %v593 = vpop.f32.mrb[0].mxu0
        %v594 = vadd.f32 %v450, %v593
        %v595 = vpop.f32.mrb[0].mxu0
        %596 = vmatprep.mubr.bf16.mxu0 0
        %597 = vmatmul.mubr.bf16.gmra.mrb[0].mxu0 %v438
        %v598 = vpop.f32.mrb[0].mxu0
        %v599 = vadd.f32 %v450, %v598
        %v600 = vpop.f32.mrb[0].mxu0
        %v601 = vpop.f32.mrb[0].mxu0
        %v602 = vadd.f32 %v450, %v601
        %v603 = vpop.f32.mrb[0].mxu0
        %604 = vmatprep.mubr.bf16.mxu0 0
        %605 = vmatmul.mubr.bf16.gmra.mrb[0].mxu0 %v439
        %v606 = vpop.f32.mrb[0].mxu0
        %v607 = vadd.f32 %v450, %v606
        %v608 = vpop.f32.mrb[0].mxu0
        %v609 = vpop.f32.mrb[0].mxu0
        %v610 = vadd.f32 %v450, %v609
        %v611 = vpop.f32.mrb[0].mxu0
        %612 = vmatprep.mubr.bf16.mxu0 0
        %613 = vmatmul.mubr.bf16.gmra.mrb[0].mxu0 %v440
        %v614 = vpop.f32.mrb[0].mxu0
        %v615 = vadd.f32 %v450, %v614
        %v616 = vpop.f32.mrb[0].mxu0
        %v617 = vpop.f32.mrb[0].mxu0
        %v618 = vadd.f32 %v450, %v617
        %v619 = vpop.f32.mrb[0].mxu0
        %620 = vmatprep.mubr.bf16.mxu0 0
        %621 = vmatmul.mubr.bf16.gmra.mrb[0].mxu0 %v441
        %v622 = vpop.f32.mrb[0].mxu0
        %v623 = vadd.f32 %v450, %v622
        %v624 = vpop.f32.mrb[0].mxu0
        %v625 = vpop.f32.mrb[0].mxu0
        %v626 = vadd.f32 %v450, %v625
        %v627 = vpop.f32.mrb[0].mxu0
        %628 = vmatprep.mubr.bf16.mxu0 0
        %629 = vmatmul.mubr.bf16.gmra.mrb[0].mxu0 %v442
        %v630 = vpop.f32.mrb[0].mxu0
        %v631 = vadd.f32 %v450, %v630
        %v632 = vpop.f32.mrb[0].mxu0
        %v633 = vpop.f32.mrb[0].mxu0
        %v634 = vadd.f32 %v450, %v633
        %v635 = vpop.f32.mrb[0].mxu0
        %636 = vmatprep.mubr.bf16.mxu0 0
        %637 = vmatmul.mubr.bf16.gmra.mrb[0].mxu0 %v443
        %v638 = vpop.f32.mrb[0].mxu0
        %v639 = vadd.f32 %v450, %v638
        %v640 = vpop.f32.mrb[0].mxu0
        %v641 = vpop.f32.mrb[0].mxu0
        %v642 = vadd.f32 %v450, %v641
        %v643 = vpop.f32.mrb[0].mxu0
        %644 = vmatprep.mubr.bf16.mxu0 0
        %645 = vmatmul.mubr.bf16.gmra.mrb[0].mxu0 %v444
        %v646 = vpop.f32.mrb[0].mxu0
        %v647 = vadd.f32 %v450, %v646
        %v648 = vpop.f32.mrb[0].mxu0
        %v649 = vpop.f32.mrb[0].mxu0
        %v650 = vadd.f32 %v450, %v649
        %v651 = vpop.f32.mrb[0].mxu0
        %652 = vmatprep.mubr.bf16.mxu0 0
        %653 = vmatmul.mubr.bf16.gmra.mrb[0].mxu0 %v445
        %v654 = vpop.f32.mrb[0].mxu0
        %v655 = vadd.f32 %v450, %v654
        %v656 = vpop.f32.mrb[0].mxu0
        %v657 = vpop.f32.mrb[0].mxu0
        %v658 = vadd.f32 %v450, %v657
        %v659 = vpop.f32.mrb[0].mxu0
        %660 = vdwg.mxu0
        %v661 = vmax.f32 %v535, 0.0
        %v662 = vmax.f32 %v538, 0.0
        %v663 = vmax.f32 %v543, 0.0
        %v664 = vmax.f32 %v546, 0.0
        %v665 = vmax.f32 %v551, 0.0
        %v666 = vmax.f32 %v554, 0.0
        %v667 = vmax.f32 %v559, 0.0
        %v668 = vmax.f32 %v562, 0.0
        %v669 = vmax.f32 %v567, 0.0
        %v670 = vmax.f32 %v570, 0.0
        %v671 = vmax.f32 %v575, 0.0
        %v672 = vmax.f32 %v578, 0.0
        %v673 = vmax.f32 %v583, 0.0
        %v674 = vmax.f32 %v586, 0.0
        %v675 = vmax.f32 %v591, 0.0
        %v676 = vmax.f32 %v594, 0.0
        %v677 = vmax.f32 %v599, 0.0
        %v678 = vmax.f32 %v602, 0.0
        %v679 = vmax.f32 %v607, 0.0
        %v680 = vmax.f32 %v610, 0.0
        %v681 = vmax.f32 %v615, 0.0
        %v682 = vmax.f32 %v618, 0.0
        %v683 = vmax.f32 %v623, 0.0
        %v684 = vmax.f32 %v626, 0.0
        %v685 = vmax.f32 %v631, 0.0
        %v686 = vmax.f32 %v634, 0.0
        %v687 = vmax.f32 %v639, 0.0
        %v688 = vmax.f32 %v642, 0.0
        %v689 = vmax.f32 %v647, 0.0
        %v690 = vmax.f32 %v650, 0.0
        %v691 = vmax.f32 %v655, 0.0
        %v692 = vmax.f32 %v658, 0.0
        %v693 = vld [vmem:[#allocation8] sm:$0xf]
        %v694 = vld [vmem:[#allocation8 + $0x4] sm:$0xf]
        %v695 = vld [vmem:[#allocation8 + $0x8] sm:$0xf]
        %v696 = vld [vmem:[#allocation8 + $0xc] sm:$0xf]
        %v697 = vld [vmem:[#allocation8 + $0x10] sm:$0xf]
        %v698 = vld [vmem:[#allocation8 + $0x14] sm:$0xf]
        %v699 = vld [vmem:[#allocation8 + $0x18] sm:$0xf]
        %v700 = vld [vmem:[#allocation8 + $0x1c] sm:$0xf]
        %v701 = vld [vmem:[#allocation8 + $0x20] sm:$0xf]
        %v702 = vld [vmem:[#allocation8 + $0x24] sm:$0xf]
        %v703 = vld [vmem:[#allocation8 + $0x28] sm:$0xf]
        %v704 = vld [vmem:[#allocation8 + $0x2c] sm:$0xf]
        %v705 = vld [vmem:[#allocation8 + $0x30] sm:$0xf]
        %v706 = vld [vmem:[#allocation8 + $0x34] sm:$0xf]
        %v707 = vld [vmem:[#allocation8 + $0x38] sm:$0xf]
        %v708 = vld [vmem:[#allocation8 + $0x3c] sm:$0xf]
        %v709 = vld [vmem:[#allocation10] sm:$0x1]
        %v710 = vpack.c.bf16 %v662, %v661
        %v711 = vpack.c.bf16 %v664, %v663
        %v712 = vpack.c.bf16 %v666, %v665
        %v713 = vpack.c.bf16 %v668, %v667
        %v714 = vpack.c.bf16 %v670, %v669
        %v715 = vpack.c.bf16 %v672, %v671
        %v716 = vpack.c.bf16 %v674, %v673
        %v717 = vpack.c.bf16 %v676, %v675
        %v718 = vpack.c.bf16 %v678, %v677
        %v719 = vpack.c.bf16 %v680, %v679
        %v720 = vpack.c.bf16 %v682, %v681
        %v721 = vpack.c.bf16 %v684, %v683
        %v722 = vpack.c.bf16 %v686, %v685
        %v723 = vpack.c.bf16 %v688, %v687
        %v724 = vpack.c.bf16 %v690, %v689
        %v725 = vpack.c.bf16 %v692, %v691
        %v727 = vlaneseq
        %v728 = vshrl.u32 %v727, 7
        %v729 = vsub.s32 0, %v728
        %v730 = vrot.slane %v709, %v729
        %v748 = vunpack.c.l.b16 %v693
        %v749 = vunpack.c.l.b16 %v694
        %v750 = vunpack.c.l.b16 %v695
        %v751 = vunpack.c.l.b16 %v696
        %v752 = vunpack.c.l.b16 %v697
        %v753 = vunpack.c.l.b16 %v698
        %v754 = vunpack.c.l.b16 %v699
        %v755 = vunpack.c.l.b16 %v700
        %v756 = vunpack.c.l.b16 %v701
        %v757 = vunpack.c.l.b16 %v702
        %v758 = vunpack.c.l.b16 %v703
        %v759 = vunpack.c.l.b16 %v704
        %v760 = vunpack.c.l.b16 %v705
        %v761 = vunpack.c.l.b16 %v706
        %v762 = vunpack.c.l.b16 %v707
        %v763 = vunpack.c.l.b16 %v708
        %v764 = vpack.c.b16 %v749, %v748
        %v765 = vpack.c.b16 %v751, %v750
        %v766 = vpack.c.b16 %v753, %v752
        %v767 = vpack.c.b16 %v755, %v754
        %v768 = vpack.c.b16 %v757, %v756
        %v769 = vpack.c.b16 %v759, %v758
        %v770 = vpack.c.b16 %v761, %v760
        %v771 = vpack.c.b16 %v763, %v762
        %780 = vmatprep.subr.bf16.mxu0 0
        %781 = vmatpush1.bf16.msra.mxu0 %v764
        %782 = vmatprep.subr.bf16.mxu0 0
        %783 = vmatpush1.bf16.msra.mxu0 %v765
        %784 = vmatprep.subr.bf16.mxu0 0
        %785 = vmatpush1.bf16.msra.mxu0 %v766
        %786 = vmatprep.subr.bf16.mxu0 0
        %787 = vmatpush1.bf16.msra.mxu0 %v767
        %788 = vmatprep.subr.bf16.mxu0 0
        %789 = vmatpush1.bf16.msra.mxu0 %v768
        %790 = vmatprep.subr.bf16.mxu0 0
        %791 = vmatpush1.bf16.msra.mxu0 %v769
        %792 = vmatprep.subr.bf16.mxu0 0
        %793 = vmatpush1.bf16.msra.mxu0 %v770
        %794 = vmatprep.subr.bf16.mxu0 0
        %795 = vmatpush1.bf16.msra.mxu0 %v771
        %796 = vmatprep.subr.bf16.mxu0 0
        %797 = vmatpush1.bf16.msra.mxu0 0
        %798 = vmatprep.subr.bf16.mxu0 0
        %799 = vmatpush1.bf16.msra.mxu0 0
        %800 = vmatprep.subr.bf16.mxu0 0
        %801 = vmatpush1.bf16.msra.mxu0 0
        %802 = vmatprep.subr.bf16.mxu0 0
        %803 = vmatpush1.bf16.msra.mxu0 0
        %804 = vmatprep.subr.bf16.mxu0 0
        %805 = vmatpush1.bf16.msra.mxu0 0
        %806 = vmatprep.subr.bf16.mxu0 0
        %807 = vmatpush1.bf16.msra.mxu0 0
        %808 = vmatprep.subr.bf16.mxu0 0
        %809 = vmatpush1.bf16.msra.mxu0 0
        %810 = vmatprep.subr.bf16.mxu0 0
        %811 = vmatpush1.bf16.msra.mxu0 0
        %812 = vmatprep.mubr.bf16.mxu0 0
        %813 = vmatmul.mubr.bf16.gmra.mrb[0].mxu0 %v710
        %v814 = vpop.f32.mrb[0].mxu0
        %v815 = vadd.f32 %v730, %v814
        %v816 = vpop.f32.mrb[0].mxu0
        %v817 = vpop.f32.mrb[0].mxu0
        %v818 = vadd.f32 %v730, %v817
        %v819 = vpop.f32.mrb[0].mxu0
        %820 = vmatprep.mubr.bf16.mxu0 0
        %821 = vmatmul.mubr.bf16.gmra.mrb[0].mxu0 %v711
        %v822 = vpop.f32.mrb[0].mxu0
        %v823 = vadd.f32 %v730, %v822
        %v824 = vpop.f32.mrb[0].mxu0
        %v825 = vpop.f32.mrb[0].mxu0
        %v826 = vadd.f32 %v730, %v825
        %v827 = vpop.f32.mrb[0].mxu0
        %828 = vmatprep.mubr.bf16.mxu0 0
        %829 = vmatmul.mubr.bf16.gmra.mrb[0].mxu0 %v712
        %v830 = vpop.f32.mrb[0].mxu0
        %v831 = vadd.f32 %v730, %v830
        %v832 = vpop.f32.mrb[0].mxu0
        %v833 = vpop.f32.mrb[0].mxu0
        %v834 = vadd.f32 %v730, %v833
        %v835 = vpop.f32.mrb[0].mxu0
        %836 = vmatprep.mubr.bf16.mxu0 0
        %837 = vmatmul.mubr.bf16.gmra.mrb[0].mxu0 %v713
        %v838 = vpop.f32.mrb[0].mxu0
        %v839 = vadd.f32 %v730, %v838
        %v840 = vpop.f32.mrb[0].mxu0
        %v841 = vpop.f32.mrb[0].mxu0
        %v842 = vadd.f32 %v730, %v841
        %v843 = vpop.f32.mrb[0].mxu0
        %844 = vmatprep.mubr.bf16.mxu0 0
        %845 = vmatmul.mubr.bf16.gmra.mrb[0].mxu0 %v714
        %v846 = vpop.f32.mrb[0].mxu0
        %v847 = vadd.f32 %v730, %v846
        %v848 = vpop.f32.mrb[0].mxu0
        %v849 = vpop.f32.mrb[0].mxu0
        %v850 = vadd.f32 %v730, %v849
        %v851 = vpop.f32.mrb[0].mxu0
        %852 = vmatprep.mubr.bf16.mxu0 0
        %853 = vmatmul.mubr.bf16.gmra.mrb[0].mxu0 %v715
        %v854 = vpop.f32.mrb[0].mxu0
        %v855 = vadd.f32 %v730, %v854
        %v856 = vpop.f32.mrb[0].mxu0
        %v857 = vpop.f32.mrb[0].mxu0
        %v858 = vadd.f32 %v730, %v857
        %v859 = vpop.f32.mrb[0].mxu0
        %860 = vmatprep.mubr.bf16.mxu0 0
        %861 = vmatmul.mubr.bf16.gmra.mrb[0].mxu0 %v716
        %v862 = vpop.f32.mrb[0].mxu0
        %v863 = vadd.f32 %v730, %v862
        %v864 = vpop.f32.mrb[0].mxu0
        %v865 = vpop.f32.mrb[0].mxu0
        %v866 = vadd.f32 %v730, %v865
        %v867 = vpop.f32.mrb[0].mxu0
        %868 = vmatprep.mubr.bf16.mxu0 0
        %869 = vmatmul.mubr.bf16.gmra.mrb[0].mxu0 %v717
        %v870 = vpop.f32.mrb[0].mxu0
        %v871 = vadd.f32 %v730, %v870
        %v872 = vpop.f32.mrb[0].mxu0
        %v873 = vpop.f32.mrb[0].mxu0
        %v874 = vadd.f32 %v730, %v873
        %v875 = vpop.f32.mrb[0].mxu0
        %876 = vmatprep.mubr.bf16.mxu0 0
        %877 = vmatmul.mubr.bf16.gmra.mrb[0].mxu0 %v718
        %v878 = vpop.f32.mrb[0].mxu0
        %v879 = vadd.f32 %v730, %v878
        %v880 = vpop.f32.mrb[0].mxu0
        %v881 = vpop.f32.mrb[0].mxu0
        %v882 = vadd.f32 %v730, %v881
        %v883 = vpop.f32.mrb[0].mxu0
        %884 = vmatprep.mubr.bf16.mxu0 0
        %885 = vmatmul.mubr.bf16.gmra.mrb[0].mxu0 %v719
        %v886 = vpop.f32.mrb[0].mxu0
        %v887 = vadd.f32 %v730, %v886
        %v888 = vpop.f32.mrb[0].mxu0
        %v889 = vpop.f32.mrb[0].mxu0
        %v890 = vadd.f32 %v730, %v889
        %v891 = vpop.f32.mrb[0].mxu0
        %892 = vmatprep.mubr.bf16.mxu0 0
        %893 = vmatmul.mubr.bf16.gmra.mrb[0].mxu0 %v720
        %v894 = vpop.f32.mrb[0].mxu0
        %v895 = vadd.f32 %v730, %v894
        %v896 = vpop.f32.mrb[0].mxu0
        %v897 = vpop.f32.mrb[0].mxu0
        %v898 = vadd.f32 %v730, %v897
        %v899 = vpop.f32.mrb[0].mxu0
        %900 = vmatprep.mubr.bf16.mxu0 0
        %901 = vmatmul.mubr.bf16.gmra.mrb[0].mxu0 %v721
        %v902 = vpop.f32.mrb[0].mxu0
        %v903 = vadd.f32 %v730, %v902
        %v904 = vpop.f32.mrb[0].mxu0
        %v905 = vpop.f32.mrb[0].mxu0
        %v906 = vadd.f32 %v730, %v905
        %v907 = vpop.f32.mrb[0].mxu0
        %908 = vmatprep.mubr.bf16.mxu0 0
        %909 = vmatmul.mubr.bf16.gmra.mrb[0].mxu0 %v722
        %v910 = vpop.f32.mrb[0].mxu0
        %v911 = vadd.f32 %v730, %v910
        %v912 = vpop.f32.mrb[0].mxu0
        %v913 = vpop.f32.mrb[0].mxu0
        %v914 = vadd.f32 %v730, %v913
        %v915 = vpop.f32.mrb[0].mxu0
        %916 = vmatprep.mubr.bf16.mxu0 0
        %917 = vmatmul.mubr.bf16.gmra.mrb[0].mxu0 %v723
        %v918 = vpop.f32.mrb[0].mxu0
        %v919 = vadd.f32 %v730, %v918
        %v920 = vpop.f32.mrb[0].mxu0
        %v921 = vpop.f32.mrb[0].mxu0
        %v922 = vadd.f32 %v730, %v921
        %v923 = vpop.f32.mrb[0].mxu0
        %924 = vmatprep.mubr.bf16.mxu0 0
        %925 = vmatmul.mubr.bf16.gmra.mrb[0].mxu0 %v724
        %v926 = vpop.f32.mrb[0].mxu0
        %v927 = vadd.f32 %v730, %v926
        %v928 = vpop.f32.mrb[0].mxu0
        %v929 = vpop.f32.mrb[0].mxu0
        %v930 = vadd.f32 %v730, %v929
        %v931 = vpop.f32.mrb[0].mxu0
        %932 = vmatprep.mubr.bf16.mxu0 0
        %933 = vmatmul.mubr.bf16.gmra.mrb[0].mxu0 %v725
        %v934 = vpop.f32.mrb[0].mxu0
        %v935 = vadd.f32 %v730, %v934
        %v936 = vpop.f32.mrb[0].mxu0
        %v937 = vpop.f32.mrb[0].mxu0
        %v938 = vadd.f32 %v730, %v937
        %v939 = vpop.f32.mrb[0].mxu0
        %940 = vdwg.mxu0
        %v941 = vmax.f32 %v815, 0.0
        %v942 = vmax.f32 %v818, 0.0
        %v943 = vmax.f32 %v823, 0.0
        %v944 = vmax.f32 %v826, 0.0
        %v945 = vmax.f32 %v831, 0.0
        %v946 = vmax.f32 %v834, 0.0
        %v947 = vmax.f32 %v839, 0.0
        %v948 = vmax.f32 %v842, 0.0
        %v949 = vmax.f32 %v847, 0.0
        %v950 = vmax.f32 %v850, 0.0
        %v951 = vmax.f32 %v855, 0.0
        %v952 = vmax.f32 %v858, 0.0
        %v953 = vmax.f32 %v863, 0.0
        %v954 = vmax.f32 %v866, 0.0
        %v955 = vmax.f32 %v871, 0.0
        %v956 = vmax.f32 %v874, 0.0
        %v957 = vmax.f32 %v879, 0.0
        %v958 = vmax.f32 %v882, 0.0
        %v959 = vmax.f32 %v887, 0.0
        %v960 = vmax.f32 %v890, 0.0
        %v961 = vmax.f32 %v895, 0.0
        %v962 = vmax.f32 %v898, 0.0
        %v963 = vmax.f32 %v903, 0.0
        %v964 = vmax.f32 %v906, 0.0
        %v965 = vmax.f32 %v911, 0.0
        %v966 = vmax.f32 %v914, 0.0
        %v967 = vmax.f32 %v919, 0.0
        %v968 = vmax.f32 %v922, 0.0
        %v969 = vmax.f32 %v927, 0.0
        %v970 = vmax.f32 %v930, 0.0
        %v971 = vmax.f32 %v935, 0.0
        %v972 = vmax.f32 %v938, 0.0
        %v973 = vld [vmem:[#allocation11] sm:$0xf]
        %v974 = vld [vmem:[#allocation11 + $0x4] sm:$0xf]
        %v975 = vld [vmem:[#allocation11 + $0x8] sm:$0xf]
        %v976 = vld [vmem:[#allocation11 + $0xc] sm:$0xf]
        %v977 = vld [vmem:[#allocation11 + $0x10] sm:$0xf]
        %v978 = vld [vmem:[#allocation11 + $0x14] sm:$0xf]
        %v979 = vld [vmem:[#allocation11 + $0x18] sm:$0xf]
        %v980 = vld [vmem:[#allocation11 + $0x1c] sm:$0xf]
        %v981 = vld [vmem:[#allocation11 + $0x20] sm:$0xf]
        %v982 = vld [vmem:[#allocation11 + $0x24] sm:$0xf]
        %v983 = vld [vmem:[#allocation11 + $0x28] sm:$0xf]
        %v984 = vld [vmem:[#allocation11 + $0x2c] sm:$0xf]
        %v985 = vld [vmem:[#allocation11 + $0x30] sm:$0xf]
        %v986 = vld [vmem:[#allocation11 + $0x34] sm:$0xf]
        %v987 = vld [vmem:[#allocation11 + $0x38] sm:$0xf]
        %v988 = vld [vmem:[#allocation11 + $0x3c] sm:$0xf]
        %v989 = vld [vmem:[#allocation13] sm:$0x1]
        %v990 = vpack.c.bf16 %v942, %v941
        %v991 = vpack.c.bf16 %v944, %v943
        %v992 = vpack.c.bf16 %v946, %v945
        %v993 = vpack.c.bf16 %v948, %v947
        %v994 = vpack.c.bf16 %v950, %v949
        %v995 = vpack.c.bf16 %v952, %v951
        %v996 = vpack.c.bf16 %v954, %v953
        %v997 = vpack.c.bf16 %v956, %v955
        %v998 = vpack.c.bf16 %v958, %v957
        %v999 = vpack.c.bf16 %v960, %v959
        %v1000 = vpack.c.bf16 %v962, %v961
        %v1001 = vpack.c.bf16 %v964, %v963
        %v1002 = vpack.c.bf16 %v966, %v965
        %v1003 = vpack.c.bf16 %v968, %v967
        %v1004 = vpack.c.bf16 %v970, %v969
        %v1005 = vpack.c.bf16 %v972, %v971
        %v1007 = vlaneseq
        %v1008 = vshrl.u32 %v1007, 7
        %v1009 = vsub.s32 0, %v1008
        %v1010 = vrot.slane %v989, %v1009
        %v1028 = vunpack.c.l.b16 %v973
        %v1029 = vunpack.c.l.b16 %v974
        %v1030 = vunpack.c.l.b16 %v975
        %v1031 = vunpack.c.l.b16 %v976
        %v1032 = vunpack.c.l.b16 %v977
        %v1033 = vunpack.c.l.b16 %v978
        %v1034 = vunpack.c.l.b16 %v979
        %v1035 = vunpack.c.l.b16 %v980
        %v1036 = vunpack.c.l.b16 %v981
        %v1037 = vunpack.c.l.b16 %v982
        %v1038 = vunpack.c.l.b16 %v983
        %v1039 = vunpack.c.l.b16 %v984
        %v1040 = vunpack.c.l.b16 %v985
        %v1041 = vunpack.c.l.b16 %v986
        %v1042 = vunpack.c.l.b16 %v987
        %v1043 = vunpack.c.l.b16 %v988
        %v1044 = vpack.c.b16 %v1029, %v1028
        %v1045 = vpack.c.b16 %v1031, %v1030
        %v1046 = vpack.c.b16 %v1033, %v1032
        %v1047 = vpack.c.b16 %v1035, %v1034
        %v1048 = vpack.c.b16 %v1037, %v1036
        %v1049 = vpack.c.b16 %v1039, %v1038
        %v1050 = vpack.c.b16 %v1041, %v1040
        %v1051 = vpack.c.b16 %v1043, %v1042
        %1060 = vmatprep.subr.bf16.mxu0 0
        %1061 = vmatpush1.bf16.msra.mxu0 %v1044
        %1062 = vmatprep.subr.bf16.mxu0 0
        %1063 = vmatpush1.bf16.msra.mxu0 %v1045
        %1064 = vmatprep.subr.bf16.mxu0 0
        %1065 = vmatpush1.bf16.msra.mxu0 %v1046
        %1066 = vmatprep.subr.bf16.mxu0 0
        %1067 = vmatpush1.bf16.msra.mxu0 %v1047
        %1068 = vmatprep.subr.bf16.mxu0 0
        %1069 = vmatpush1.bf16.msra.mxu0 %v1048
        %1070 = vmatprep.subr.bf16.mxu0 0
        %1071 = vmatpush1.bf16.msra.mxu0 %v1049
        %1072 = vmatprep.subr.bf16.mxu0 0
        %1073 = vmatpush1.bf16.msra.mxu0 %v1050
        %1074 = vmatprep.subr.bf16.mxu0 0
        %1075 = vmatpush1.bf16.msra.mxu0 %v1051
        %1076 = vmatprep.subr.bf16.mxu0 0
        %1077 = vmatpush1.bf16.msra.mxu0 0
        %1078 = vmatprep.subr.bf16.mxu0 0
        %1079 = vmatpush1.bf16.msra.mxu0 0
        %1080 = vmatprep.subr.bf16.mxu0 0
        %1081 = vmatpush1.bf16.msra.mxu0 0
        %1082 = vmatprep.subr.bf16.mxu0 0
        %1083 = vmatpush1.bf16.msra.mxu0 0
        %1084 = vmatprep.subr.bf16.mxu0 0
        %1085 = vmatpush1.bf16.msra.mxu0 0
        %1086 = vmatprep.subr.bf16.mxu0 0
        %1087 = vmatpush1.bf16.msra.mxu0 0
        %1088 = vmatprep.subr.bf16.mxu0 0
        %1089 = vmatpush1.bf16.msra.mxu0 0
        %1090 = vmatprep.subr.bf16.mxu0 0
        %1091 = vmatpush1.bf16.msra.mxu0 0
        %1092 = vmatprep.mubr.bf16.mxu0 0
        %1093 = vmatmul.mubr.bf16.gmra.mrb[0].mxu0 %v990
        %v1094 = vpop.f32.mrb[0].mxu0
        %v1095 = vadd.f32 %v1010, %v1094
        %v1096 = vpop.f32.mrb[0].mxu0
        %v1097 = vpop.f32.mrb[0].mxu0
        %v1098 = vadd.f32 %v1010, %v1097
        %v1099 = vpop.f32.mrb[0].mxu0
        %1100 = vmatprep.mubr.bf16.mxu0 0
        %1101 = vmatmul.mubr.bf16.gmra.mrb[0].mxu0 %v991
        %v1102 = vpop.f32.mrb[0].mxu0
        %v1103 = vadd.f32 %v1010, %v1102
        %v1104 = vpop.f32.mrb[0].mxu0
        %v1105 = vpop.f32.mrb[0].mxu0
        %v1106 = vadd.f32 %v1010, %v1105
        %v1107 = vpop.f32.mrb[0].mxu0
        %1108 = vmatprep.mubr.bf16.mxu0 0
        %1109 = vmatmul.mubr.bf16.gmra.mrb[0].mxu0 %v992
        %v1110 = vpop.f32.mrb[0].mxu0
        %v1111 = vadd.f32 %v1010, %v1110
        %v1112 = vpop.f32.mrb[0].mxu0
        %v1113 = vpop.f32.mrb[0].mxu0
        %v1114 = vadd.f32 %v1010, %v1113
        %v1115 = vpop.f32.mrb[0].mxu0
        %1116 = vmatprep.mubr.bf16.mxu0 0
        %1117 = vmatmul.mubr.bf16.gmra.mrb[0].mxu0 %v993
        %v1118 = vpop.f32.mrb[0].mxu0
        %v1119 = vadd.f32 %v1010, %v1118
        %v1120 = vpop.f32.mrb[0].mxu0
        %v1121 = vpop.f32.mrb[0].mxu0
        %v1122 = vadd.f32 %v1010, %v1121
        %v1123 = vpop.f32.mrb[0].mxu0
        %1124 = vmatprep.mubr.bf16.mxu0 0
        %1125 = vmatmul.mubr.bf16.gmra.mrb[0].mxu0 %v994
        %v1126 = vpop.f32.mrb[0].mxu0
        %v1127 = vadd.f32 %v1010, %v1126
        %v1128 = vpop.f32.mrb[0].mxu0
        %v1129 = vpop.f32.mrb[0].mxu0
        %v1130 = vadd.f32 %v1010, %v1129
        %v1131 = vpop.f32.mrb[0].mxu0
        %1132 = vmatprep.mubr.bf16.mxu0 0
        %1133 = vmatmul.mubr.bf16.gmra.mrb[0].mxu0 %v995
        %v1134 = vpop.f32.mrb[0].mxu0
        %v1135 = vadd.f32 %v1010, %v1134
        %v1136 = vpop.f32.mrb[0].mxu0
        %v1137 = vpop.f32.mrb[0].mxu0
        %v1138 = vadd.f32 %v1010, %v1137
        %v1139 = vpop.f32.mrb[0].mxu0
        %1140 = vmatprep.mubr.bf16.mxu0 0
        %1141 = vmatmul.mubr.bf16.gmra.mrb[0].mxu0 %v996
        %v1142 = vpop.f32.mrb[0].mxu0
        %v1143 = vadd.f32 %v1010, %v1142
        %v1144 = vpop.f32.mrb[0].mxu0
        %v1145 = vpop.f32.mrb[0].mxu0
        %v1146 = vadd.f32 %v1010, %v1145
        %v1147 = vpop.f32.mrb[0].mxu0
        %1148 = vmatprep.mubr.bf16.mxu0 0
        %1149 = vmatmul.mubr.bf16.gmra.mrb[0].mxu0 %v997
        %v1150 = vpop.f32.mrb[0].mxu0
        %v1151 = vadd.f32 %v1010, %v1150
        %v1152 = vpop.f32.mrb[0].mxu0
        %v1153 = vpop.f32.mrb[0].mxu0
        %v1154 = vadd.f32 %v1010, %v1153
        %v1155 = vpop.f32.mrb[0].mxu0
        %1156 = vmatprep.mubr.bf16.mxu0 0
        %1157 = vmatmul.mubr.bf16.gmra.mrb[0].mxu0 %v998
        %v1158 = vpop.f32.mrb[0].mxu0
        %v1159 = vadd.f32 %v1010, %v1158
        %v1160 = vpop.f32.mrb[0].mxu0
        %v1161 = vpop.f32.mrb[0].mxu0
        %v1162 = vadd.f32 %v1010, %v1161
        %v1163 = vpop.f32.mrb[0].mxu0
        %1164 = vmatprep.mubr.bf16.mxu0 0
        %1165 = vmatmul.mubr.bf16.gmra.mrb[0].mxu0 %v999
        %v1166 = vpop.f32.mrb[0].mxu0
        %v1167 = vadd.f32 %v1010, %v1166
        %v1168 = vpop.f32.mrb[0].mxu0
        %v1169 = vpop.f32.mrb[0].mxu0
        %v1170 = vadd.f32 %v1010, %v1169
        %v1171 = vpop.f32.mrb[0].mxu0
        %1172 = vmatprep.mubr.bf16.mxu0 0
        %1173 = vmatmul.mubr.bf16.gmra.mrb[0].mxu0 %v1000
        %v1174 = vpop.f32.mrb[0].mxu0
        %v1175 = vadd.f32 %v1010, %v1174
        %v1176 = vpop.f32.mrb[0].mxu0
        %v1177 = vpop.f32.mrb[0].mxu0
        %v1178 = vadd.f32 %v1010, %v1177
        %v1179 = vpop.f32.mrb[0].mxu0
        %1180 = vmatprep.mubr.bf16.mxu0 0
        %1181 = vmatmul.mubr.bf16.gmra.mrb[0].mxu0 %v1001
        %v1182 = vpop.f32.mrb[0].mxu0
        %v1183 = vadd.f32 %v1010, %v1182
        %v1184 = vpop.f32.mrb[0].mxu0
        %v1185 = vpop.f32.mrb[0].mxu0
        %v1186 = vadd.f32 %v1010, %v1185
        %v1187 = vpop.f32.mrb[0].mxu0
        %1188 = vmatprep.mubr.bf16.mxu0 0
        %1189 = vmatmul.mubr.bf16.gmra.mrb[0].mxu0 %v1002
        %v1190 = vpop.f32.mrb[0].mxu0
        %v1191 = vadd.f32 %v1010, %v1190
        %v1192 = vpop.f32.mrb[0].mxu0
        %v1193 = vpop.f32.mrb[0].mxu0
        %v1194 = vadd.f32 %v1010, %v1193
        %v1195 = vpop.f32.mrb[0].mxu0
        %1196 = vmatprep.mubr.bf16.mxu0 0
        %1197 = vmatmul.mubr.bf16.gmra.mrb[0].mxu0 %v1003
        %v1198 = vpop.f32.mrb[0].mxu0
        %v1199 = vadd.f32 %v1010, %v1198
        %v1200 = vpop.f32.mrb[0].mxu0
        %v1201 = vpop.f32.mrb[0].mxu0
        %v1202 = vadd.f32 %v1010, %v1201
        %v1203 = vpop.f32.mrb[0].mxu0
        %1204 = vmatprep.mubr.bf16.mxu0 0
        %1205 = vmatmul.mubr.bf16.gmra.mrb[0].mxu0 %v1004
        %v1206 = vpop.f32.mrb[0].mxu0
        %v1207 = vadd.f32 %v1010, %v1206
        %v1208 = vpop.f32.mrb[0].mxu0
        %v1209 = vpop.f32.mrb[0].mxu0
        %v1210 = vadd.f32 %v1010, %v1209
        %v1211 = vpop.f32.mrb[0].mxu0
        %1212 = vmatprep.mubr.bf16.mxu0 0
        %1213 = vmatmul.mubr.bf16.gmra.mrb[0].mxu0 %v1005
        %v1214 = vpop.f32.mrb[0].mxu0
        %v1215 = vadd.f32 %v1010, %v1214
        %v1216 = vpop.f32.mrb[0].mxu0
        %v1217 = vpop.f32.mrb[0].mxu0
        %v1218 = vadd.f32 %v1010, %v1217
        %v1219 = vpop.f32.mrb[0].mxu0
        %1220 = vdwg.mxu0
        %1221 = vst [vmem:[%s377] sm:$0xff] %v1095
        %1222 = vst [vmem:[%s377 + $0x8] sm:$0xff] %v1098
        %1223 = vst [vmem:[%s377 + $0x10] sm:$0xff] %v1103
        %1224 = vst [vmem:[%s377 + $0x18] sm:$0xff] %v1106
        %1225 = vst [vmem:[%s377 + $0x20] sm:$0xff] %v1111
        %1226 = vst [vmem:[%s377 + $0x28] sm:$0xff] %v1114
        %1227 = vst [vmem:[%s377 + $0x30] sm:$0xff] %v1119
        %1228 = vst [vmem:[%s377 + $0x38] sm:$0xff] %v1122
        %1229 = vst [vmem:[%s377 + $0x40] sm:$0xff] %v1127
        %1230 = vst [vmem:[%s377 + $0x48] sm:$0xff] %v1130
        %1231 = vst [vmem:[%s377 + $0x50] sm:$0xff] %v1135
        %1232 = vst [vmem:[%s377 + $0x58] sm:$0xff] %v1138
        %1233 = vst [vmem:[%s377 + $0x60] sm:$0xff] %v1143
        %1234 = vst [vmem:[%s377 + $0x68] sm:$0xff] %v1146
        %1235 = vst [vmem:[%s377 + $0x70] sm:$0xff] %v1151
        %1236 = vst [vmem:[%s377 + $0x78] sm:$0xff] %v1154
        %1237 = vst [vmem:[%s377 + $0x80] sm:$0xff] %v1159
        %1238 = vst [vmem:[%s377 + $0x88] sm:$0xff] %v1162
        %1239 = vst [vmem:[%s377 + $0x90] sm:$0xff] %v1167
        %1240 = vst [vmem:[%s377 + $0x98] sm:$0xff] %v1170
        %1241 = vst [vmem:[%s377 + $0xa0] sm:$0xff] %v1175
        %1242 = vst [vmem:[%s377 + $0xa8] sm:$0xff] %v1178
        %1243 = vst [vmem:[%s377 + $0xb0] sm:$0xff] %v1183
        %1244 = vst [vmem:[%s377 + $0xb8] sm:$0xff] %v1186
        %1245 = vst [vmem:[%s377 + $0xc0] sm:$0xff] %v1191
        %1246 = vst [vmem:[%s377 + $0xc8] sm:$0xff] %v1194
        %1247 = vst [vmem:[%s377 + $0xd0] sm:$0xff] %v1199
        %1248 = vst [vmem:[%s377 + $0xd8] sm:$0xff] %v1202
        %1249 = vst [vmem:[%s377 + $0xe0] sm:$0xff] %v1207
        %1250 = vst [vmem:[%s377 + $0xe8] sm:$0xff] %v1210
        %1251 = vst [vmem:[%s377 + $0xf0] sm:$0xff] %v1215
        %1252 = vst [vmem:[%s377 + $0xf8] sm:$0xff] %v1218
        %s1253 = sand.u32 %s187, 1
        %s1254 = scalar_lea.sflag [#allocation4], %s1253
        %s1255 = sand.u32 %s187, 1
        %s1256 = smul.addr %s1255, 256
        %s1257 = scalar_lea.vmem [#allocation14], %s1256
        // Predicated region
        $region77: #{_run_pallas.1} parent=47 // pred_check
          %p1258 = pneg %p197
        $region78: #{_run_pallas.1} parent=47 // pred_check_branch
          %1260 = sbr.rel (%p1258) target = $region80
        $region79: #{_run_pallas.1} parent=47 // pred_region
          %s1261 = smul.u32 32, %s27
          %s1263 = ssub.s32 4096, 4096
          %1264 = vsyncadd %s1254, %s1263
          %s1265 = smul.addr %s1261, 128
          %s1266 = scalar_lea.hbm %s7, %s1265
          %s1267 = sshll.u32 %s1257, 4
          %s1268 = int_to_ptr.vmem [resolvable:$true] %s1267
          %1273 = dma.vmem_to_hbm [thread:$0]  %s1268, 4096, %s1266, %s1254, 128, 128, 8
        $region80: #{_run_pallas.1} parent=47 // pred_fallthru
          _
      $region48: #{_run_pallas.1} parent=5 // pred_fallthru
        _
      %p1274 = scmp.le.s32.totalorder 2, %s22
      // Predicated region
      $region81: #{_run_pallas.1} parent=5 // pred_check
        %p1275 = pneg %p1274
      $region82: #{_run_pallas.1} parent=5 // pred_check_branch
        %1277 = sbr.rel (%p1275) target = $region84
      $region83: #{_run_pallas.1} parent=5 // pred_region
        %s1278 = ssub.s32 %s22, 2
        // Predicated region
        $region85: #{_run_pallas.1} parent=83 // pred_check
          %p1279 = pneg %p203
        $region86: #{_run_pallas.1} parent=83 // pred_check_branch
          %1281 = sbr.rel (%p1279) target = $region88
        $region87: #{_run_pallas.1} parent=83 // pred_region
          %s1282 = sand.u32 %s188, 1
          %s1283 = scalar_lea.sflag [#allocation4], %s1282
          %s1284 = sand.u32 %s188, 1
          %s1285 = smul.addr %s1284, 256
          %s1286 = scalar_lea.vmem [#allocation14], %s1285
          %1287 = dma.done %s1283, 4096
        $region88: #{_run_pallas.1} parent=83 // pred_fallthru
          _
      $region84: #{_run_pallas.1} parent=5 // pred_fallthru
        _
    $region6: #{_run_pallas.1} parent=1 // loop_footer
      %s26 = sadd.s32 1, %s22
    $region7: #{_run_pallas.1} parent=1 // loop_footer_branch
      %21 = sbr.rel target = $region3
    $region8: #{_run_pallas.1} parent=1 // loop_exit
      _
    %1288 = vsyncpa [#allocation3], 1
    %s1289 = scalar_lea.sflag [#allocation3], 1
    %1290 = vsyncpa %s1289, 1
    %1291 = vsyncpa [#allocation6], 1
    %1292 = vsyncpa [#allocation9], 1
    %1293 = vsyncpa [#allocation12], 1
    %1294 = vsyncpa [#allocation4], 1
    %s1295 = scalar_lea.sflag [#allocation4], 1
    %1296 = vsyncpa %s1295, 1

</llo_original>
